<compile_context>
chip_gen: v5e
topology: v5e:2x2
jax: 0.10.0
libtpu: 0.0.40
codegen_flags: <defaults>
</compile_context>

<pallas_src>
import numpy as np
import jax
import jax.numpy as jnp
from jax.experimental import pallas as pl
from jax.experimental.pallas import tpu as pltpu


_PAD_MODE = {
    "reflect": "reflect", "refl": "reflect",
    "replicate": "edge", "repl": "edge",
    "zero": "zero",
}


def _binomial_1d(filt_size: int) -> np.ndarray:
    table = {
        1: [1.0],
        2: [1.0, 1.0],
        3: [1.0, 2.0, 1.0],
        4: [1.0, 3.0, 3.0, 1.0],
        5: [1.0, 4.0, 6.0, 4.0, 1.0],
        6: [1.0, 5.0, 10.0, 10.0, 5.0, 1.0],
        7: [1.0, 6.0, 15.0, 20.0, 15.0, 6.0, 1.0],
    }
    a = np.asarray(table[filt_size], dtype=np.float64)
    return a / a.sum()


def _blur_matrix(L, Lo, filt_size, stride, p_lo, taps, pad_mode):
    """Constant (L, Lo) matrix fusing 1-D blur + padding + stride along one axis."""
    m = np.zeros((L, Lo), dtype=np.float64)
    for o in range(Lo):
        for j in range(filt_size):
            src = o * stride + j - p_lo
            if src < 0:
                if pad_mode == "reflect":
                    src = -src
                elif pad_mode == "edge":
                    src = 0
                else:                      # zero pad contributes nothing
                    continue
            elif src >= L:
                if pad_mode == "reflect":
                    src = 2 * (L - 1) - src
                elif pad_mode == "edge":
                    src = L - 1
                else:
                    continue
            m[src, o] += float(taps[j])
    return m


def _vmem_capacity_bytes():
    """Physical VMEM per core; conservative 64 MiB (v7x) if the query fails."""
    try:
        info = pltpu.get_tpu_info()
        for attr in ("vmem_capacity_bytes", "vmem_bytes"):
            cap = getattr(info, attr, None)
            if cap:
                return int(cap)
    except Exception:
        pass
    return 64 << 20


def _pick_block_channels(nc, h, w, itemsize, target_bytes, min_steps=8):
    """Channels per block: byte-capped, with >= min_steps grid steps when possible."""
    per_ch = max(1, h * w * itemsize)
    cb = max(1, min(nc, target_bytes // per_ch))
    cb = min(cb, max(1, nc // min_steps))       # keep the pipeline / megacore busy
    # Prefer a divisor of nc (all DMAs full-sized); otherwise accept a partial
    # trailing block (Pallas masks the out-of-bounds writeback).
    best = 1
    for d in range(1, cb + 1):
        if nc % d == 0:
            best = d
    return best if 2 * best > cb else cb


def _make_kernel(cb, compute_dtype, precision):
    def kernel(x_ref, a_ref, b_ref, o_ref):
        a = a_ref[...]                    # (Ho, H)  constant, resident in VMEM
        b = b_ref[...]                    # (W, Wo)

        def channel(c, carry):
            xc = x_ref[c].astype(compute_dtype)                 # (H, W)
            # Horizontal blur + W pad + W stride: contract W (lanes) on the MXU.
            h1 = jax.lax.dot_general(
                xc, b, (((1,), (0,)), ((), ())),
                precision=precision, preferred_element_type=jnp.float32)
            h1 = h1.astype(compute_dtype)                       # (H, Wo)
            # Vertical blur + H pad + H stride: second constant matmul.
            oc = jax.lax.dot_general(
                a, h1, (((1,), (0,)), ((), ())),
                precision=precision, preferred_element_type=jnp.float32)
            o_ref[c] = oc.astype(o_ref.dtype)                   # (Ho, Wo)
            return carry

        jax.lax.fori_loop(0, cb, channel, None, unroll=(cb <= 8))

    return kernel


def downsample(x_nchw, pad_type="reflect", filt_size=3, stride=2,
               channels=None, pad_off=0):
    """JAX/Pallas equivalent of Downsample.forward. Input/output are NCHW."""
    del channels  # kept for API parity with the PyTorch module (unused)
    N, C, H, W = x_nchw.shape
    p_lo = int(1.0 * (filt_size - 1) / 2) + pad_off
    p_hi = int(np.ceil(1.0 * (filt_size - 1) / 2)) + pad_off
    pad_mode = _PAD_MODE[pad_type]

    if filt_size == 1:
        # No blur; pure strided subsample (glue only, no hot loop).
        if pad_off == 0:
            return x_nchw[:, :, ::stride, ::stride]
        np_mode = "constant" if pad_mode == "zero" else pad_mode
        xp = jnp.pad(x_nchw, ((0, 0), (0, 0), (p_lo, p_hi), (p_lo, p_hi)),
                     mode=np_mode)
        return xp[:, :, ::stride, ::stride]

    if pad_mode == "reflect" and (max(p_lo, p_hi) >= H or max(p_lo, p_hi) >= W):
        raise ValueError(
            f"reflect padding requires pad < spatial dim "
            f"(pad=({p_lo},{p_hi}), H={H}, W={W})")

    Ho = (H + p_lo + p_hi - filt_size) // stride + 1
    Wo = (W + p_lo + p_hi - filt_size) // stride + 1
    taps = _binomial_1d(filt_size)

    # Dtype policy: bf16 stays bf16 end-to-end (operands bf16, f32 accumulation);
    # f32 uses HIGHEST so accuracy matches the PyTorch f32 depthwise conv.
    # (On v5e with very wide images, Precision.HIGH / bf16 halves MXU passes.)
    if x_nchw.dtype == jnp.bfloat16:
        compute_dtype, precision = jnp.bfloat16, None
    else:
        compute_dtype, precision = jnp.float32, jax.lax.Precision.HIGHEST

    # Constant blur matrices (exact binomial weights, padding folded in).
    a = jnp.asarray(
        _blur_matrix(H, Ho, filt_size, stride, p_lo, taps, pad_mode).T,
        dtype=compute_dtype)                                    # (Ho, H)
    b = jnp.asarray(
        _blur_matrix(W, Wo, filt_size, stride, p_lo, taps, pad_mode),
        dtype=compute_dtype)                                    # (W, Wo)

    NC = N * C
    itemsize = int(np.dtype(x_nchw.dtype).itemsize)
    c_item = int(np.dtype(compute_dtype).itemsize)

    # Generation-aware block sizing: bigger blocks where VMEM is 128 MiB
    # (v5e/v6e), smaller on v7x (64 MiB) so double-buffering survives.
    vmem_cap = _vmem_capacity_bytes()
    target_in_bytes = (12 << 20) if vmem_cap >= (96 << 20) else (6 << 20)
    cb = _pick_block_channels(NC, H, W, itemsize, target_in_bytes)

    in_blk = cb * H * W * itemsize
    out_blk = cb * Ho * Wo * itemsize
    mats = (Ho * H + W * Wo) * c_item
    interm = (H * Wo + Ho * Wo) * 4 * 4          # per-channel temporaries + slack
    vmem_limit = max(32 << 20,
                     2 * (in_blk + out_blk + mats) + interm + (16 << 20))
    vmem_limit = min(vmem_limit, (vmem_cap * 3) // 4)

    x3 = x_nchw.reshape(NC, H, W)                # free major-dim merge
    kernel = _make_kernel(cb, compute_dtype, precision)

    out3 = pl.pallas_call(
        kernel,
        out_shape=jax.ShapeDtypeStruct((NC, Ho, Wo), x_nchw.dtype),
        grid_spec=pltpu.PrefetchScalarGridSpec(
            num_scalar_prefetch=0,
            grid=(pl.cdiv(NC, cb),),
            in_specs=[
                pl.BlockSpec((cb, H, W), lambda i: (i, 0, 0)),
                pl.BlockSpec((Ho, H), lambda i: (0, 0)),   # constant, DMA'd once
                pl.BlockSpec((W, Wo), lambda i: (0, 0)),   # constant, DMA'd once
            ],
            out_specs=pl.BlockSpec((cb, Ho, Wo), lambda i: (i, 0, 0)),
        ),
        compiler_params=pltpu.CompilerParams(
            dimension_semantics=("parallel",),
            vmem_limit_bytes=int(vmem_limit),
        ),
    )(x3, a, b)
    return out3.reshape(N, C, Ho, Wo)


def _reference_downsample(x_nchw, pad_type="reflect", filt_size=3, stride=2,
                          pad_off=0):
    """Pure-JAX reference (depthwise conv) mirroring the PyTorch forward."""
    N, C, H, W = x_nchw.shape
    p_lo = int(1.0 * (filt_size - 1) / 2) + pad_off
    p_hi = int(np.ceil(1.0 * (filt_size - 1) / 2)) + pad_off
    mode = _PAD_MODE[pad_type]
    np_mode = "constant" if mode == "zero" else mode
    xp = jnp.pad(x_nchw, ((0, 0), (0, 0), (p_lo, p_hi), (p_lo, p_hi)),
                 mode=np_mode)
    a = _binomial_1d(filt_size)
    f = jnp.asarray(np.outer(a, a), jnp.float32)
    kern = jnp.broadcast_to(f[None, None], (C, 1, filt_size, filt_size))
    out = jax.lax.conv_general_dilated(
        xp.astype(jnp.float32), kern,
        window_strides=(stride, stride), padding="VALID",
        feature_group_count=C,
        dimension_numbers=("NCHW", "OIHW", "NCHW"),
        precision=jax.lax.Precision.HIGHEST,
    )
    return out.astype(x_nchw.dtype)


if __name__ == "__main__":
    key = jax.random.PRNGKey(0)
    x = jax.random.normal(key, (2, 4, 16, 16), dtype=jnp.float32)  # NCHW

    # f32, reflect padding.
    out = jax.block_until_ready(
        downsample(x, pad_type="reflect", filt_size=3, stride=2, channels=4))
    ref = jax.block_until_ready(
        _reference_downsample(x, pad_type="reflect", filt_size=3, stride=2))
    assert out.shape == (2, 4, 8, 8), out.shape
    err = float(jnp.max(jnp.abs(out - ref)))
    assert err < 1e-4, err

    # f32, zero padding (exercises the other matrix-construction path).
    out_z = jax.block_until_ready(
        downsample(x, pad_type="zero", filt_size=3, stride=2, channels=4))
    ref_z = jax.block_until_ready(
        _reference_downsample(x, pad_type="zero", filt_size=3, stride=2))
    err_z = float(jnp.max(jnp.abs(out_z - ref_z)))
    assert err_z < 1e-4, err_z

    # bf16 end-to-end path (bf16 MXU operands, f32 accumulation).
    xb = x.astype(jnp.bfloat16)
    out_b = jax.block_until_ready(
        downsample(xb, pad_type="reflect", filt_size=3, stride=2, channels=4))
    ref_b = jax.block_until_ready(
        _reference_downsample(xb, pad_type="reflect", filt_size=3, stride=2))
    err_b = float(jnp.max(jnp.abs(out_b.astype(jnp.float32)
                                  - ref_b.astype(jnp.float32))))
    assert err_b < 5e-2, err_b

    print("KERNEL_OK")
</pallas_src>

<mosaic_0001>
module attributes {stable_mosaic.version = 11 : i64} {
  func.func @kernel(%arg0: i32, %arg1: memref<1x16x16xf32, #tpu.memory_space<vmem>>, %arg2: memref<8x16xf32, #tpu.memory_space<vmem>>, %arg3: memref<16x8xf32, #tpu.memory_space<vmem>>, %arg4: memref<1x8x8xf32, #tpu.memory_space<vmem>>) attributes {dimension_semantics = [#tpu.dimension_semantics<parallel>], iteration_bounds = array<i64: 8>, scalar_prefetch = 0 : i64, scratch_operands = 0 : i64, tpu.core_type = #tpu.core_type<tc>, window_params = [{transform_indices = @transform_0, window_bounds = array<i64: 1, 16, 16>}, {pipeline_mode = #tpu.pipeline_mode<synchronous>, transform_indices = @transform_1, window_bounds = array<i64: 8, 16>}, {pipeline_mode = #tpu.pipeline_mode<synchronous>, transform_indices = @transform_2, window_bounds = array<i64: 16, 8>}, {transform_indices = @transform_3, window_bounds = array<i64: 1, 8, 8>}]} {
    %c0 = arith.constant 0 : index
    %c0_0 = arith.constant 0 : index
    %0 = vector.load %arg2[%c0, %c0_0] : memref<8x16xf32, #tpu.memory_space<vmem>>, vector<8x16xf32>
    %c0_1 = arith.constant 0 : index
    %c0_2 = arith.constant 0 : index
    %1 = vector.load %arg3[%c0_1, %c0_2] : memref<16x8xf32, #tpu.memory_space<vmem>>, vector<16x8xf32>
    %c0_i32 = arith.constant 0 : i32
    %2 = arith.index_cast %c0_i32 : i32 to index
    %c0_3 = arith.constant 0 : index
    %c0_4 = arith.constant 0 : index
    %3 = vector.load %arg1[%2, %c0_3, %c0_4] : memref<1x16x16xf32, #tpu.memory_space<vmem>>, vector<1x16x16xf32>
    %4 = vector.shape_cast %3 : vector<1x16x16xf32> to vector<16x16xf32>
    %cst = arith.constant dense<0.000000e+00> : vector<16x8xf32>
    %5 = tpu.matmul %4, %1, %cst {dimension_numbers = #tpu.dot_dimension_numbers<[1], [0], [0], [1], [0, 0, 1, 1], [], []>, precision = #tpu.contract_precision<fp32>} : vector<16x16xf32>, vector<16x8xf32>, vector<16x8xf32> -> vector<16x8xf32>
    %cst_5 = arith.constant dense<0.000000e+00> : vector<8x8xf32>
    %6 = tpu.matmul %0, %5, %cst_5 {dimension_numbers = #tpu.dot_dimension_numbers<[1], [0], [0], [1], [0, 0, 1, 1], [], []>, precision = #tpu.contract_precision<fp32>} : vector<8x16xf32>, vector<16x8xf32>, vector<8x8xf32> -> vector<8x8xf32>
    %7 = arith.index_cast %c0_i32 : i32 to index
    %c0_6 = arith.constant 0 : index
    %c0_7 = arith.constant 0 : index
    %8 = vector.load %arg4[%7, %c0_6, %c0_7] : memref<1x8x8xf32, #tpu.memory_space<vmem>>, vector<1x8x8xf32>
    %9 = vector.shape_cast %8 : vector<1x8x8xf32> to vector<8x8xf32>
    %10 = vector.shape_cast %6 : vector<8x8xf32> to vector<1x8x8xf32>
    tpu.vector_store %arg4[%7, %c0_6, %c0_7], %10 {strides = array<i32>} : memref<1x8x8xf32, #tpu.memory_space<vmem>>, vector<1x8x8xf32>,
    %c1_i32 = arith.constant 1 : i32
    return
  }
  func.func @transform_0(%arg0: i32) -> (i32, i32, i32) {
    %c0_i32 = arith.constant 0 : i32
    %c0_i32_0 = arith.constant 0 : i32
    %c0_i32_1 = arith.constant 0 : i32
    return %arg0, %c0_i32, %c0_i32_0 : i32, i32, i32
  }
  func.func @transform_1(%arg0: i32) -> (i32, i32) {
    %c0_i32 = arith.constant 0 : i32
    %c0_i32_0 = arith.constant 0 : i32
    %c0_i32_1 = arith.constant 0 : i32
    return %c0_i32, %c0_i32_0 : i32, i32
  }
  func.func @transform_2(%arg0: i32) -> (i32, i32) {
    %c0_i32 = arith.constant 0 : i32
    %c0_i32_0 = arith.constant 0 : i32
    %c0_i32_1 = arith.constant 0 : i32
    return %c0_i32, %c0_i32_0 : i32, i32
  }
  func.func @transform_3(%arg0: i32) -> (i32, i32, i32) {
    %c0_i32 = arith.constant 0 : i32
    %c0_i32_0 = arith.constant 0 : i32
    %c0_i32_1 = arith.constant 0 : i32
    return %arg0, %c0_i32, %c0_i32_0 : i32, i32, i32
  }
}

</mosaic_0001>

<llo_original>
// kernel: tpu_custom_call.1
$region0: #{tpu_custom_call.1}
  #allocation0 [shape = 'u32[]', space=smem, size = 0x4, offset = 0x4, fixed_abs, tag = 'smem constant byte address 0x4 - core index']
  #allocation1 [shape = 'u32[72,128]{1,0:T(1,128)}', space=vmem, size = 0x9000, scoped, tag = 'internal scratch']
  %s0 = inlined_call_operand.hbm [shape: f32[8,16,16], index: 0, kind: input, shape index: {}]
  %s1 = inlined_call_operand.vmem [shape: f32[8,16], index: 1, kind: input, shape index: {}]
  %s2 = inlined_call_operand.vmem [shape: f32[16,8], index: 2, kind: input, shape index: {}]
  %s3 = inlined_call_operand.hbm [shape: f32[8,8,8], index: 3, kind: output, shape index: {}]
  %s4 = sld [smem:[#allocation0]]
  $region49: #{tpu_custom_call.1} parent=0
    _
  %s6 = ssub.s32 1, %s4
  %s7 = scalar_select 0, %s6, %s4
  $region1: #{tpu_custom_call.1} parent=0
    #allocation2 [shape = 'u8[16384]{0}', space=vmem, size = 0x4000, scoped, tag = 'input window, operand 0']
    #allocation3 [shape = 's32[2]{0}', space=sflag, size = 0x8, scoped, tag = 'scoped memory for tpu_custom_call.1']
    #allocation4 [shape = 's32[2]{0}', space=sflag, size = 0x8, scoped, tag = 'scoped memory for tpu_custom_call.1']
    #allocation5 [shape = 'u8[8192]{0}', space=vmem, size = 0x2000, scoped, tag = 'output window, operand 0']
    %8 = vsyncpa [#allocation3], 0
    %s9 = scalar_lea.sflag [#allocation3], 1
    %10 = vsyncpa %s9, 0
    %11 = vsyncpa [#allocation4], 0
    %s12 = scalar_lea.sflag [#allocation4], 1
    %13 = vsyncpa %s12, 0
    loop: start=0, step=1, limit=10
    $region2: #{tpu_custom_call.1} parent=1 // loop_pre_header
      _
    $region3: #{tpu_custom_call.1} parent=1 // loop_header
      %s15 = sphi 0, %s19
      %p16 = scmp.ge.s32.totalorder %s15, 10
      %s25 = sphi 0, %s27
      %s28 = sphi 0, %s25
      %s29 = sphi 0, %s28
      %s45 = sphi 0, %s29
      %s49 = sphi 0, %s49
      %s51 = sphi 0, %s49
      %s52 = sphi 0, %s51
      %s66 = sphi 0, %s52
      %s70 = sphi 0, %s70
      %s72 = sphi 0, %s70
      %s73 = sphi 0, %s72
      %s87 = sphi 0, %s73
      %s93 = sphi 0, %s95
      %s96 = sphi 0, %s93
      %s97 = sphi 0, %s96
      %s113 = sphi 0, %s97
    $region4: #{tpu_custom_call.1} parent=1 // loop_header_branch
      %18 = sbr.rel (%p16) target = $region8
    $region5: #{tpu_custom_call.1} parent=1 // loop_body
      %s20 = ssub.s32 %s15, 1
      %s21 = ssub.s32 %s15, 2
      %s22 = sadd.s32 %s15, 1
      %s23 = ssub.s32 %s15, %s22
      %p24 = scmp.eq.s32.totalorder %s23, 0
      %s26 = sadd.s32 %s25, 1
      %s27 = scalar_select %p24, %s25, %s26
      %p30 = pneg %p24
      %p31 = scmp.eq.s32.totalorder %s15, 7
      %p32 = por %p30, %p31
      %p33 = scmp.ne.s32.totalorder %s25, %s28
      %p34 = scmp.eq.s32.totalorder %s15, 0
      %p35 = por %p33, %p34
      %p36 = scmp.ne.s32.totalorder %s25, %s28
      %p37 = scmp.eq.s32.totalorder %s20, 7
      %p38 = por %p36, %p37
      %p39 = scmp.ne.s32.totalorder %s28, %s29
      %p40 = scmp.eq.s32.totalorder %s20, 0
      %p41 = por %p39, %p40
      %p42 = scmp.ne.s32.totalorder %s28, %s29
      %p43 = scmp.eq.s32.totalorder %s21, 7
      %p44 = por %p42, %p43
      %p46 = scmp.ne.s32.totalorder %s29, %s45
      %p47 = scmp.eq.s32.totalorder %s21, 0
      %p48 = por %p46, %p47
      %s50 = sadd.s32 %s49, 1
      %p53 = scmp.eq.s32.totalorder %s15, 7
      %p54 = scmp.ne.s32.totalorder %s49, %s51
      %p55 = scmp.eq.s32.totalorder %s15, 0
      %p56 = por %p54, %p55
      %p57 = scmp.ne.s32.totalorder %s49, %s51
      %p58 = scmp.eq.s32.totalorder %s20, 7
      %p59 = por %p57, %p58
      %p60 = scmp.ne.s32.totalorder %s51, %s52
      %p61 = scmp.eq.s32.totalorder %s20, 0
      %p62 = por %p60, %p61
      %p63 = scmp.ne.s32.totalorder %s51, %s52
      %p64 = scmp.eq.s32.totalorder %s21, 7
      %p65 = por %p63, %p64
      %p67 = scmp.ne.s32.totalorder %s52, %s66
      %p68 = scmp.eq.s32.totalorder %s21, 0
      %p69 = por %p67, %p68
      %s71 = sadd.s32 %s70, 1
      %p74 = scmp.eq.s32.totalorder %s15, 7
      %p75 = scmp.ne.s32.totalorder %s70, %s72
      %p76 = scmp.eq.s32.totalorder %s15, 0
      %p77 = por %p75, %p76
      %p78 = scmp.ne.s32.totalorder %s70, %s72
      %p79 = scmp.eq.s32.totalorder %s20, 7
      %p80 = por %p78, %p79
      %p81 = scmp.ne.s32.totalorder %s72, %s73
      %p82 = scmp.eq.s32.totalorder %s20, 0
      %p83 = por %p81, %p82
      %p84 = scmp.ne.s32.totalorder %s72, %s73
      %p85 = scmp.eq.s32.totalorder %s21, 7
      %p86 = por %p84, %p85
      %p88 = scmp.ne.s32.totalorder %s73, %s87
      %p89 = scmp.eq.s32.totalorder %s21, 0
      %p90 = por %p88, %p89
      %s91 = ssub.s32 %s15, %s22
      %p92 = scmp.eq.s32.totalorder %s91, 0
      %s94 = sadd.s32 %s93, 1
      %s95 = scalar_select %p92, %s93, %s94
      %p98 = pneg %p92
      %p99 = scmp.eq.s32.totalorder %s15, 7
      %p100 = por %p98, %p99
      %p101 = scmp.ne.s32.totalorder %s93, %s96
      %p102 = scmp.eq.s32.totalorder %s15, 0
      %p103 = por %p101, %p102
      %p104 = scmp.ne.s32.totalorder %s93, %s96
      %p105 = scmp.eq.s32.totalorder %s20, 7
      %p106 = por %p104, %p105
      %p107 = scmp.ne.s32.totalorder %s96, %s97
      %p108 = scmp.eq.s32.totalorder %s20, 0
      %p109 = por %p107, %p108
      %p110 = scmp.ne.s32.totalorder %s96, %s97
      %p111 = scmp.eq.s32.totalorder %s21, 7
      %p112 = por %p110, %p111
      %p114 = scmp.ne.s32.totalorder %s97, %s113
      %p115 = scmp.eq.s32.totalorder %s21, 0
      %p116 = por %p114, %p115
      %p117 = scmp.le.s32.totalorder 1, %s15
      %p118 = scmp.lt.s32.totalorder %s15, 9
      %p119 = pnand %p117, %p118
      %p120 = pneg %p119
      // Predicated region
      $region9: #{tpu_custom_call.1} parent=5 // pred_check
        _
      $region10: #{tpu_custom_call.1} parent=5 // pred_check_branch
        %122 = sbr.rel (%p119) target = $region12
      $region11: #{tpu_custom_call.1} parent=5 // pred_region
        %s123 = ssub.s32 %s15, 1
        // Predicated region
        $region13: #{tpu_custom_call.1} parent=11 // pred_check
          %p124 = pneg %p62
        $region14: #{tpu_custom_call.1} parent=11 // pred_check_branch
          %126 = sbr.rel (%p124) target = $region16
        $region15: #{tpu_custom_call.1} parent=11 // pred_region
          _
        $region16: #{tpu_custom_call.1} parent=11 // pred_fallthru
          _
        // Predicated region
        $region17: #{tpu_custom_call.1} parent=11 // pred_check
          %p127 = pneg %p83
        $region18: #{tpu_custom_call.1} parent=11 // pred_check_branch
          %129 = sbr.rel (%p127) target = $region20
        $region19: #{tpu_custom_call.1} parent=11 // pred_region
          _
        $region20: #{tpu_custom_call.1} parent=11 // pred_fallthru
          _
      $region12: #{tpu_custom_call.1} parent=5 // pred_fallthru
        _
      %p130 = scmp.lt.s32.totalorder %s15, 8
      // Predicated region
      $region21: #{tpu_custom_call.1} parent=5 // pred_check
        %p131 = pneg %p130
      $region22: #{tpu_custom_call.1} parent=5 // pred_check_branch
        %133 = sbr.rel (%p131) target = $region24
      $region23: #{tpu_custom_call.1} parent=5 // pred_region
        // Predicated region
        $region25: #{tpu_custom_call.1} parent=23 // pred_check
          %p134 = pneg %p35
        $region26: #{tpu_custom_call.1} parent=23 // pred_check_branch
          %136 = sbr.rel (%p134) target = $region28
        $region27: #{tpu_custom_call.1} parent=23 // pred_region
          %s137 = sand.u32 %s25, 1
          %s138 = scalar_lea.sflag [#allocation3], %s137
          %s139 = sand.u32 %s25, 1
          %s140 = smul.addr %s139, 16
          %s141 = scalar_lea.vmem [#allocation2], %s140
          %143 = vsyncadd %s138, 0
          %s144 = smul.addr %s15, 2
          %s145 = smul.addr %s144, 8
          %s146 = scalar_lea.hbm %s0, %s145
          %s147 = sshll.u32 %s146, 4
          %s148 = int_to_ptr.hbm [resolvable:$true] %s147
          %s149 = sshll.u32 %s141, 4
          %s150 = int_to_ptr.vmem [resolvable:$true] %s149
          %155 = dma.hbm_to_vmem [thread:$0]  %s148, 256, %s150, %s138, 128, 128, 8
        $region28: #{tpu_custom_call.1} parent=23 // pred_fallthru
          _
      $region24: #{tpu_custom_call.1} parent=5 // pred_fallthru
        _
      %p156 = scmp.le.s32.totalorder 1, %s15
      %p157 = scmp.lt.s32.totalorder %s15, 9
      %p158 = pnand %p156, %p157
      %p159 = pneg %p158
      // Predicated region
      $region29: #{tpu_custom_call.1} parent=5 // pred_check
        _
      $region30: #{tpu_custom_call.1} parent=5 // pred_check_branch
        %161 = sbr.rel (%p158) target = $region32
      $region31: #{tpu_custom_call.1} parent=5 // pred_region
        %s162 = ssub.s32 %s15, 1
        %s163 = sand.u32 %s28, 1
        %s164 = scalar_lea.sflag [#allocation3], %s163
        %s165 = sand.u32 %s28, 1
        %s166 = smul.addr %s165, 16
        %s167 = scalar_lea.vmem [#allocation2], %s166
        // Predicated region
        $region33: #{tpu_custom_call.1} parent=31 // pred_check
          %p168 = pneg %p41
        $region34: #{tpu_custom_call.1} parent=31 // pred_check_branch
          %170 = sbr.rel (%p168) target = $region36
        $region35: #{tpu_custom_call.1} parent=31 // pred_region
          %172 = dma.done %s164, 256
        $region36: #{tpu_custom_call.1} parent=31 // pred_fallthru
          _
        %s173 = sand.u32 %s28, 1
        %s174 = scalar_lea.sflag [#allocation3], %s173
        %s175 = sand.u32 %s28, 1
        %s176 = smul.addr %s175, 16
        %s177 = scalar_lea.vmem [#allocation2], %s176
        %p178 = pneg %p41
        %p179 = pneg %p38
        %p180 = pneg %p62
        %p181 = pneg %p59
        %p182 = pneg %p83
        %p183 = pneg %p80
        %p184 = pneg %p109
        %p185 = pneg %p106
        %s186 = sand.u32 %s96, 1
        %s187 = scalar_lea.sflag [#allocation4], %s186
        %s188 = sand.u32 %s96, 1
        %s189 = smul.addr %s188, 8
        %s190 = scalar_lea.vmem [#allocation5], %s189
        %v191 = vld [vmem:[%s1] sm:$0xff]
        %v192 = vld [vmem:[%s2] sm:$0xff]
        %v193 = vld [vmem:[%s2 + $0x8] sm:$0xff]
        %v194 = vld [vmem:[%s167] sm:$0xff]
        %v195 = vld [vmem:[%s167 + $0x8] sm:$0xff]
        %vm196 = vcmask 130048
        %v198 = vsel %vm196, %v194, 0
        %v201 = vsel %vm196, %v195, 0
        %203 = vmatpush.msra.mxu0 0.0
        %204 = vmatpush.msra.mxu0 0.0
        %205 = vmatpush.msra.mxu0 0.0
        %206 = vmatpush.msra.mxu0 0.0
        %207 = vmatpush.msra.mxu0 0.0
        %208 = vmatpush.msra.mxu0 0.0
        %209 = vmatpush.msra.mxu0 0.0
        %210 = vmatpush.msra.mxu0 0.0
        %211 = vmatpush.msra.mxu0 0.0
        %212 = vmatpush.msra.mxu0 0.0
        %213 = vmatpush.msra.mxu0 0.0
        %214 = vmatpush.msra.mxu0 0.0
        %215 = vmatpush.msra.mxu0 0.0
        %216 = vmatpush.msra.mxu0 0.0
        %v217 = vand.u32 %v193, 4294901760
        %218 = vmatpush.msra.mxu0 %v217
        %v219 = vand.u32 %v192, 4294901760
        %220 = vmatpush.msra.mxu0 %v219
        %v221 = vand.u32 %v198, 4294901760
        %v222 = vsub.f32 %v198, %v221
        %v223 = vand.u32 %v222, 4294901760
        %v224 = vsub.f32 %v222, %v223
        %v225 = vand.u32 %v224, 4294901760
        %226 = vmatmul.f32.gmra.mxu0 %v225
        %v227 = vpop.f32.mrf.mxu0
        %v228 = vadd.f32 0.0, %v227
        %v229 = vand.u32 %v201, 4294901760
        %v230 = vsub.f32 %v201, %v229
        %v231 = vand.u32 %v230, 4294901760
        %v232 = vsub.f32 %v230, %v231
        %v233 = vand.u32 %v232, 4294901760
        %234 = vmatmul.f32.gmra.mxu0 %v233
        %v235 = vpop.f32.mrf.mxu0
        %v236 = vadd.f32 0.0, %v235
        %237 = vdwg.mxu0
        %238 = vmatpush.msra.mxu0 0.0
        %239 = vmatpush.msra.mxu0 0.0
        %240 = vmatpush.msra.mxu0 0.0
        %241 = vmatpush.msra.mxu0 0.0
        %242 = vmatpush.msra.mxu0 0.0
        %243 = vmatpush.msra.mxu0 0.0
        %244 = vmatpush.msra.mxu0 0.0
        %245 = vmatpush.msra.mxu0 0.0
        %246 = vmatpush.msra.mxu0 0.0
        %247 = vmatpush.msra.mxu0 0.0
        %248 = vmatpush.msra.mxu0 0.0
        %249 = vmatpush.msra.mxu0 0.0
        %250 = vmatpush.msra.mxu0 0.0
        %251 = vmatpush.msra.mxu0 0.0
        %v252 = vand.u32 %v193, 4294901760
        %v253 = vsub.f32 %v193, %v252
        %v254 = vand.u32 %v253, 4294901760
        %v255 = vsub.f32 %v253, %v254
        %v256 = vand.u32 %v255, 4294901760
        %257 = vmatpush.msra.mxu0 %v256
        %v258 = vand.u32 %v192, 4294901760
        %v259 = vsub.f32 %v192, %v258
        %v260 = vand.u32 %v259, 4294901760
        %v261 = vsub.f32 %v259, %v260
        %v262 = vand.u32 %v261, 4294901760
        %263 = vmatpush.msra.mxu0 %v262
        %v264 = vand.u32 %v198, 4294901760
        %265 = vmatmul.f32.gmra.mxu0 %v264
        %v266 = vpop.f32.mrf.mxu0
        %v267 = vadd.f32 %v228, %v266
        %v268 = vand.u32 %v201, 4294901760
        %269 = vmatmul.f32.gmra.mxu0 %v268
        %v270 = vpop.f32.mrf.mxu0
        %v271 = vadd.f32 %v236, %v270
        %272 = vdwg.mxu0
        %273 = vmatpush.msra.mxu0 0.0
        %274 = vmatpush.msra.mxu0 0.0
        %275 = vmatpush.msra.mxu0 0.0
        %276 = vmatpush.msra.mxu0 0.0
        %277 = vmatpush.msra.mxu0 0.0
        %278 = vmatpush.msra.mxu0 0.0
        %279 = vmatpush.msra.mxu0 0.0
        %280 = vmatpush.msra.mxu0 0.0
        %281 = vmatpush.msra.mxu0 0.0
        %282 = vmatpush.msra.mxu0 0.0
        %283 = vmatpush.msra.mxu0 0.0
        %284 = vmatpush.msra.mxu0 0.0
        %285 = vmatpush.msra.mxu0 0.0
        %286 = vmatpush.msra.mxu0 0.0
        %v287 = vand.u32 %v193, 4294901760
        %v288 = vsub.f32 %v193, %v287
        %289 = vmatpush.msra.mxu0 %v288
        %v290 = vand.u32 %v192, 4294901760
        %v291 = vsub.f32 %v192, %v290
        %292 = vmatpush.msra.mxu0 %v291
        %v293 = vand.u32 %v198, 4294901760
        %v294 = vsub.f32 %v198, %v293
        %295 = vmatmul.f32.gmra.mxu0 %v294
        %v296 = vpop.f32.mrf.mxu0
        %v297 = vadd.f32 %v267, %v296
        %v298 = vand.u32 %v201, 4294901760
        %v299 = vsub.f32 %v201, %v298
        %300 = vmatmul.f32.gmra.mxu0 %v299
        %v301 = vpop.f32.mrf.mxu0
        %v302 = vadd.f32 %v271, %v301
        %303 = vdwg.mxu0
        %304 = vmatpush.msra.mxu0 0.0
        %305 = vmatpush.msra.mxu0 0.0
        %306 = vmatpush.msra.mxu0 0.0
        %307 = vmatpush.msra.mxu0 0.0
        %308 = vmatpush.msra.mxu0 0.0
        %309 = vmatpush.msra.mxu0 0.0
        %310 = vmatpush.msra.mxu0 0.0
        %311 = vmatpush.msra.mxu0 0.0
        %312 = vmatpush.msra.mxu0 0.0
        %313 = vmatpush.msra.mxu0 0.0
        %314 = vmatpush.msra.mxu0 0.0
        %315 = vmatpush.msra.mxu0 0.0
        %316 = vmatpush.msra.mxu0 0.0
        %317 = vmatpush.msra.mxu0 0.0
        %v318 = vand.u32 %v193, 4294901760
        %319 = vmatpush.msra.mxu0 %v318
        %v320 = vand.u32 %v192, 4294901760
        %321 = vmatpush.msra.mxu0 %v320
        %v322 = vand.u32 %v198, 4294901760
        %v323 = vsub.f32 %v198, %v322
        %v324 = vand.u32 %v323, 4294901760
        %325 = vmatmul.f32.gmra.mxu0 %v324
        %v326 = vpop.f32.mrf.mxu0
        %v327 = vadd.f32 %v297, %v326
        %v328 = vand.u32 %v201, 4294901760
        %v329 = vsub.f32 %v201, %v328
        %v330 = vand.u32 %v329, 4294901760
        %331 = vmatmul.f32.gmra.mxu0 %v330
        %v332 = vpop.f32.mrf.mxu0
        %v333 = vadd.f32 %v302, %v332
        %334 = vdwg.mxu0
        %335 = vmatpush.msra.mxu0 0.0
        %336 = vmatpush.msra.mxu0 0.0
        %337 = vmatpush.msra.mxu0 0.0
        %338 = vmatpush.msra.mxu0 0.0
        %339 = vmatpush.msra.mxu0 0.0
        %340 = vmatpush.msra.mxu0 0.0
        %341 = vmatpush.msra.mxu0 0.0
        %342 = vmatpush.msra.mxu0 0.0
        %343 = vmatpush.msra.mxu0 0.0
        %344 = vmatpush.msra.mxu0 0.0
        %345 = vmatpush.msra.mxu0 0.0
        %346 = vmatpush.msra.mxu0 0.0
        %347 = vmatpush.msra.mxu0 0.0
        %348 = vmatpush.msra.mxu0 0.0
        %v349 = vand.u32 %v193, 4294901760
        %v350 = vsub.f32 %v193, %v349
        %v351 = vand.u32 %v350, 4294901760
        %352 = vmatpush.msra.mxu0 %v351
        %v353 = vand.u32 %v192, 4294901760
        %v354 = vsub.f32 %v192, %v353
        %v355 = vand.u32 %v354, 4294901760
        %356 = vmatpush.msra.mxu0 %v355
        %v357 = vand.u32 %v198, 4294901760
        %358 = vmatmul.f32.gmra.mxu0 %v357
        %v359 = vpop.f32.mrf.mxu0
        %v360 = vadd.f32 %v327, %v359
        %v361 = vand.u32 %v201, 4294901760
        %362 = vmatmul.f32.gmra.mxu0 %v361
        %v363 = vpop.f32.mrf.mxu0
        %v364 = vadd.f32 %v333, %v363
        %365 = vdwg.mxu0
        %366 = vmatpush.msra.mxu0 0.0
        %367 = vmatpush.msra.mxu0 0.0
        %368 = vmatpush.msra.mxu0 0.0
        %369 = vmatpush.msra.mxu0 0.0
        %370 = vmatpush.msra.mxu0 0.0
        %371 = vmatpush.msra.mxu0 0.0
        %372 = vmatpush.msra.mxu0 0.0
        %373 = vmatpush.msra.mxu0 0.0
        %374 = vmatpush.msra.mxu0 0.0
        %375 = vmatpush.msra.mxu0 0.0
        %376 = vmatpush.msra.mxu0 0.0
        %377 = vmatpush.msra.mxu0 0.0
        %378 = vmatpush.msra.mxu0 0.0
        %379 = vmatpush.msra.mxu0 0.0
        %v380 = vand.u32 %v193, 4294901760
        %381 = vmatpush.msra.mxu0 %v380
        %v382 = vand.u32 %v192, 4294901760
        %383 = vmatpush.msra.mxu0 %v382
        %v384 = vand.u32 %v198, 4294901760
        %385 = vmatmul.f32.gmra.mxu0 %v384
        %v386 = vpop.f32.mrf.mxu0
        %v387 = vadd.f32 %v360, %v386
        %v388 = vand.u32 %v201, 4294901760
        %389 = vmatmul.f32.gmra.mxu0 %v388
        %v390 = vpop.f32.mrf.mxu0
        %v391 = vadd.f32 %v364, %v390
        %392 = vdwg.mxu0
        %v394 = vsel %vm196, %v191, 0
        %396 = vmatpush.msra.mxu0 0.0
        %397 = vmatpush.msra.mxu0 0.0
        %398 = vmatpush.msra.mxu0 0.0
        %399 = vmatpush.msra.mxu0 0.0
        %400 = vmatpush.msra.mxu0 0.0
        %401 = vmatpush.msra.mxu0 0.0
        %402 = vmatpush.msra.mxu0 0.0
        %403 = vmatpush.msra.mxu0 0.0
        %404 = vmatpush.msra.mxu0 0.0
        %405 = vmatpush.msra.mxu0 0.0
        %406 = vmatpush.msra.mxu0 0.0
        %407 = vmatpush.msra.mxu0 0.0
        %408 = vmatpush.msra.mxu0 0.0
        %409 = vmatpush.msra.mxu0 0.0
        %v410 = vand.u32 %v391, 4294901760
        %411 = vmatpush.msra.mxu0 %v410
        %v412 = vand.u32 %v387, 4294901760
        %413 = vmatpush.msra.mxu0 %v412
        %v414 = vand.u32 %v394, 4294901760
        %v415 = vsub.f32 %v394, %v414
        %v416 = vand.u32 %v415, 4294901760
        %v417 = vsub.f32 %v415, %v416
        %v418 = vand.u32 %v417, 4294901760
        %419 = vmatmul.f32.gmra.mxu0 %v418
        %v420 = vpop.f32.mrf.mxu0
        %v421 = vadd.f32 0.0, %v420
        %422 = vdwg.mxu0
        %423 = vmatpush.msra.mxu0 0.0
        %424 = vmatpush.msra.mxu0 0.0
        %425 = vmatpush.msra.mxu0 0.0
        %426 = vmatpush.msra.mxu0 0.0
        %427 = vmatpush.msra.mxu0 0.0
        %428 = vmatpush.msra.mxu0 0.0
        %429 = vmatpush.msra.mxu0 0.0
        %430 = vmatpush.msra.mxu0 0.0
        %431 = vmatpush.msra.mxu0 0.0
        %432 = vmatpush.msra.mxu0 0.0
        %433 = vmatpush.msra.mxu0 0.0
        %434 = vmatpush.msra.mxu0 0.0
        %435 = vmatpush.msra.mxu0 0.0
        %436 = vmatpush.msra.mxu0 0.0
        %v437 = vand.u32 %v391, 4294901760
        %v438 = vsub.f32 %v391, %v437
        %v439 = vand.u32 %v438, 4294901760
        %v440 = vsub.f32 %v438, %v439
        %v441 = vand.u32 %v440, 4294901760
        %442 = vmatpush.msra.mxu0 %v441
        %v443 = vand.u32 %v387, 4294901760
        %v444 = vsub.f32 %v387, %v443
        %v445 = vand.u32 %v444, 4294901760
        %v446 = vsub.f32 %v444, %v445
        %v447 = vand.u32 %v446, 4294901760
        %448 = vmatpush.msra.mxu0 %v447
        %v449 = vand.u32 %v394, 4294901760
        %450 = vmatmul.f32.gmra.mxu0 %v449
        %v451 = vpop.f32.mrf.mxu0
        %v452 = vadd.f32 %v421, %v451
        %453 = vdwg.mxu0
        %454 = vmatpush.msra.mxu0 0.0
        %455 = vmatpush.msra.mxu0 0.0
        %456 = vmatpush.msra.mxu0 0.0
        %457 = vmatpush.msra.mxu0 0.0
        %458 = vmatpush.msra.mxu0 0.0
        %459 = vmatpush.msra.mxu0 0.0
        %460 = vmatpush.msra.mxu0 0.0
        %461 = vmatpush.msra.mxu0 0.0
        %462 = vmatpush.msra.mxu0 0.0
        %463 = vmatpush.msra.mxu0 0.0
        %464 = vmatpush.msra.mxu0 0.0
        %465 = vmatpush.msra.mxu0 0.0
        %466 = vmatpush.msra.mxu0 0.0
        %467 = vmatpush.msra.mxu0 0.0
        %v468 = vand.u32 %v391, 4294901760
        %v469 = vsub.f32 %v391, %v468
        %470 = vmatpush.msra.mxu0 %v469
        %v471 = vand.u32 %v387, 4294901760
        %v472 = vsub.f32 %v387, %v471
        %473 = vmatpush.msra.mxu0 %v472
        %v474 = vand.u32 %v394, 4294901760
        %v475 = vsub.f32 %v394, %v474
        %476 = vmatmul.f32.gmra.mxu0 %v475
        %v477 = vpop.f32.mrf.mxu0
        %v478 = vadd.f32 %v452, %v477
        %479 = vdwg.mxu0
        %480 = vmatpush.msra.mxu0 0.0
        %481 = vmatpush.msra.mxu0 0.0
        %482 = vmatpush.msra.mxu0 0.0
        %483 = vmatpush.msra.mxu0 0.0
        %484 = vmatpush.msra.mxu0 0.0
        %485 = vmatpush.msra.mxu0 0.0
        %486 = vmatpush.msra.mxu0 0.0
        %487 = vmatpush.msra.mxu0 0.0
        %488 = vmatpush.msra.mxu0 0.0
        %489 = vmatpush.msra.mxu0 0.0
        %490 = vmatpush.msra.mxu0 0.0
        %491 = vmatpush.msra.mxu0 0.0
        %492 = vmatpush.msra.mxu0 0.0
        %493 = vmatpush.msra.mxu0 0.0
        %v494 = vand.u32 %v391, 4294901760
        %495 = vmatpush.msra.mxu0 %v494
        %v496 = vand.u32 %v387, 4294901760
        %497 = vmatpush.msra.mxu0 %v496
        %v498 = vand.u32 %v394, 4294901760
        %v499 = vsub.f32 %v394, %v498
        %v500 = vand.u32 %v499, 4294901760
        %501 = vmatmul.f32.gmra.mxu0 %v500
        %v502 = vpop.f32.mrf.mxu0
        %v503 = vadd.f32 %v478, %v502
        %504 = vdwg.mxu0
        %505 = vmatpush.msra.mxu0 0.0
        %506 = vmatpush.msra.mxu0 0.0
        %507 = vmatpush.msra.mxu0 0.0
        %508 = vmatpush.msra.mxu0 0.0
        %509 = vmatpush.msra.mxu0 0.0
        %510 = vmatpush.msra.mxu0 0.0
        %511 = vmatpush.msra.mxu0 0.0
        %512 = vmatpush.msra.mxu0 0.0
        %513 = vmatpush.msra.mxu0 0.0
        %514 = vmatpush.msra.mxu0 0.0
        %515 = vmatpush.msra.mxu0 0.0
        %516 = vmatpush.msra.mxu0 0.0
        %517 = vmatpush.msra.mxu0 0.0
        %518 = vmatpush.msra.mxu0 0.0
        %v519 = vand.u32 %v391, 4294901760
        %v520 = vsub.f32 %v391, %v519
        %v521 = vand.u32 %v520, 4294901760
        %522 = vmatpush.msra.mxu0 %v521
        %v523 = vand.u32 %v387, 4294901760
        %v524 = vsub.f32 %v387, %v523
        %v525 = vand.u32 %v524, 4294901760
        %526 = vmatpush.msra.mxu0 %v525
        %v527 = vand.u32 %v394, 4294901760
        %528 = vmatmul.f32.gmra.mxu0 %v527
        %v529 = vpop.f32.mrf.mxu0
        %v530 = vadd.f32 %v503, %v529
        %531 = vdwg.mxu0
        %532 = vmatpush.msra.mxu0 0.0
        %533 = vmatpush.msra.mxu0 0.0
        %534 = vmatpush.msra.mxu0 0.0
        %535 = vmatpush.msra.mxu0 0.0
        %536 = vmatpush.msra.mxu0 0.0
        %537 = vmatpush.msra.mxu0 0.0
        %538 = vmatpush.msra.mxu0 0.0
        %539 = vmatpush.msra.mxu0 0.0
        %540 = vmatpush.msra.mxu0 0.0
        %541 = vmatpush.msra.mxu0 0.0
        %542 = vmatpush.msra.mxu0 0.0
        %543 = vmatpush.msra.mxu0 0.0
        %544 = vmatpush.msra.mxu0 0.0
        %545 = vmatpush.msra.mxu0 0.0
        %v546 = vand.u32 %v391, 4294901760
        %547 = vmatpush.msra.mxu0 %v546
        %v548 = vand.u32 %v387, 4294901760
        %549 = vmatpush.msra.mxu0 %v548
        %v550 = vand.u32 %v394, 4294901760
        %551 = vmatmul.f32.gmra.mxu0 %v550
        %v552 = vpop.f32.mrf.mxu0
        %v553 = vadd.f32 %v530, %v552
        %554 = vdwg.mxu0
        %vm555 = vcmask 64512
        %556 = vst.msk [vmem:[%s190] sm:$0xff] %vm555, %v553
        %s557 = sand.u32 %s96, 1
        %s558 = scalar_lea.sflag [#allocation4], %s557
        %s559 = sand.u32 %s96, 1
        %s560 = smul.addr %s559, 8
        %s561 = scalar_lea.vmem [#allocation5], %s560
        // Predicated region
        $region37: #{tpu_custom_call.1} parent=31 // pred_check
          %p562 = pneg %p106
        $region38: #{tpu_custom_call.1} parent=31 // pred_check_branch
          %564 = sbr.rel (%p562) target = $region40
        $region39: #{tpu_custom_call.1} parent=31 // pred_region
          %566 = vsyncadd %s558, 0
          %s567 = smul.addr %s20, 8
          %s568 = scalar_lea.hbm %s3, %s567
          %s570 = sshll.u32 %s561, 4
          %s571 = int_to_ptr.vmem [resolvable:$true] %s570
          %s572 = sshll.u32 %s568, 4
          %s573 = int_to_ptr.hbm [resolvable:$true] %s572
          %575 = dma.vmem_to_hbm [thread:$0]  %s571, 128, %s573, %s558
        $region40: #{tpu_custom_call.1} parent=31 // pred_fallthru
          _
      $region32: #{tpu_custom_call.1} parent=5 // pred_fallthru
        _
      %p576 = scmp.le.s32.totalorder 2, %s15
      // Predicated region
      $region41: #{tpu_custom_call.1} parent=5 // pred_check
        %p577 = pneg %p576
      $region42: #{tpu_custom_call.1} parent=5 // pred_check_branch
        %579 = sbr.rel (%p577) target = $region44
      $region43: #{tpu_custom_call.1} parent=5 // pred_region
        %s580 = ssub.s32 %s15, 2
        // Predicated region
        $region45: #{tpu_custom_call.1} parent=43 // pred_check
          %p581 = pneg %p112
        $region46: #{tpu_custom_call.1} parent=43 // pred_check_branch
          %583 = sbr.rel (%p581) target = $region48
        $region47: #{tpu_custom_call.1} parent=43 // pred_region
          %s584 = sand.u32 %s97, 1
          %s585 = scalar_lea.sflag [#allocation4], %s584
          %s586 = sand.u32 %s97, 1
          %s587 = smul.addr %s586, 8
          %s588 = scalar_lea.vmem [#allocation5], %s587
          %590 = dma.done %s585, 128
        $region48: #{tpu_custom_call.1} parent=43 // pred_fallthru
          _
      $region44: #{tpu_custom_call.1} parent=5 // pred_fallthru
        _
    $region6: #{tpu_custom_call.1} parent=1 // loop_footer
      %s19 = sadd.s32 1, %s15
    $region7: #{tpu_custom_call.1} parent=1 // loop_footer_branch
      %14 = sbr.rel target = $region3
    $region8: #{tpu_custom_call.1} parent=1 // loop_exit
      _
    %591 = vsyncpa [#allocation3], 1
    %s592 = scalar_lea.sflag [#allocation3], 1
    %593 = vsyncpa %s592, 1
    %594 = vsyncpa [#allocation4], 1
    %s595 = scalar_lea.sflag [#allocation4], 1
    %596 = vsyncpa %s595, 1

</llo_original>
